<compile_context>
chip_gen: v5e
topology: v5e:2x2
jax: 0.10.0
libtpu: 0.0.40
codegen_flags: <defaults>
</compile_context>

<pallas_src>
import jax
import jax.numpy as jnp
from jax.experimental import pallas as pl
from jax.experimental.pallas import tpu as pltpu


_VMEM_BUDGET_BYTES = 40 * 1024 * 1024   # tile-sizing budget: safe on v5e/v6e/v7x
_VMEM_LIMIT_BYTES = 48 * 1024 * 1024    # explicit scoped-VMEM limit (<= all gens)


def _round_up(n, m):
    return ((n + m - 1) // m) * m


def _cdiv(a, b):
    return -(-a // b)


def _arg_kernel(x_ref, w_ref, b_ref, o_ref):
    # logits = x @ W + b   (MXU matmul: bf16 inputs, f32 accumulate)
    logits = jnp.dot(x_ref[...], w_ref[...], preferred_element_type=jnp.float32)
    logits = logits + b_ref[...]                      # (tm, Tp) + (1, Tp) broadcast
    # Numerically stable softmax over the last (lane) axis. Padded columns carry
    # bias = -1e30 so exp(pad - m) underflows to 0 and never pollutes the sum.
    m = jnp.max(logits, axis=-1, keepdims=True)
    e = jnp.exp(logits - m)
    s = jnp.sum(e, axis=-1, keepdims=True)
    o_ref[...] = (e / s).astype(o_ref.dtype)          # exact normalization


def prepare_arg_params(weight, bias):
    """One-time (module-init) padding/cast of the Linear parameters.

    weight: (D, T) float  -- already transposed from PyTorch's (T, D) layout.
    bias:   (T,)   float
    Returns (w_pad bf16 (D, T_pad), b_pad f32 (1, T_pad), T).
    """
    D, T = weight.shape
    lane_mult = 256 if T >= 256 else 128   # fill the 256-wide MXU N dim on v6e/v7x
    T_pad = _round_up(max(T, 128), lane_mult)
    w_pad = jnp.zeros((D, T_pad), jnp.bfloat16).at[:, :T].set(
        weight.astype(jnp.bfloat16))
    b_pad = jnp.full((1, T_pad), -1e30, jnp.float32).at[0, :T].set(
        bias.astype(jnp.float32))
    return w_pad, b_pad, T


def _derive_batch_tiling(B, D, T_pad):
    # Resident W (bf16) + bias (f32); budget as if double-buffered in case the
    # single-buffer request is not honored by this Pallas version.
    resident = 2 * (D * T_pad * 2 + T_pad * 4)
    # Per batch row: double-buffered x tile (bf16) + double-buffered out (f32).
    per_row = 2 * (D * 2) + 2 * (T_pad * 4)
    avail = _VMEM_BUDGET_BYTES - resident
    tm_cap = max(8, min(1024, (avail // per_row) // 8 * 8))
    # >=2 grid steps once the batch is non-trivial so v7x's 2nd TC gets work.
    min_tiles = 2 if B >= 256 else 1
    n_tiles = max(min_tiles, _cdiv(B, tm_cap))
    tm = min(tm_cap, _round_up(_cdiv(B, n_tiles), 8))   # balanced tiles
    return tm, n_tiles * tm


def _pallas_forward(x_p, w_pad, b_pad, tm, single_buffer_consts):
    B_pad, D = x_p.shape
    T_pad = w_pad.shape[1]
    const_kw = {"pipeline_mode": pl.Buffered(1)} if single_buffer_consts else {}
    return pl.pallas_call(
        _arg_kernel,
        out_shape=jax.ShapeDtypeStruct((B_pad, T_pad), jnp.float32),
        grid=(B_pad // tm,),
        in_specs=[
            pl.BlockSpec((tm, D), lambda i: (i, 0)),                  # x: batch-tiled
            pl.BlockSpec((D, T_pad), lambda i: (0, 0), **const_kw),   # W: VMEM-resident
            pl.BlockSpec((1, T_pad), lambda i: (0, 0), **const_kw),   # b: VMEM-resident
        ],
        out_specs=pl.BlockSpec((tm, T_pad), lambda i: (i, 0)),
        compiler_params=pltpu.CompilerParams(
            dimension_semantics=("parallel",),       # shards batch over v7x's 2 TCs
            vmem_limit_bytes=_VMEM_LIMIT_BYTES,
        ),
    )(x_p, w_pad, b_pad)


def arg_module_forward(x, w_pad, b_pad, T):
    """softmax(x @ W + b, axis=1) with pre-padded params from prepare_arg_params."""
    B, D = x.shape
    T_pad = w_pad.shape[1]
    tm, B_pad = _derive_batch_tiling(B, D, T_pad)

    x_p = x.astype(jnp.bfloat16)
    if B_pad != B:
        x_p = jnp.zeros((B_pad, D), jnp.bfloat16).at[:B].set(x_p)

    try:
        out = _pallas_forward(x_p, w_pad, b_pad, tm, single_buffer_consts=True)
    except Exception:
        # Some Pallas versions reject pipeline_mode on pallas_call BlockSpecs;
        # fall back to default double-buffering of the (small) constant W / b.
        out = _pallas_forward(x_p, w_pad, b_pad, tm, single_buffer_consts=False)

    return out[:B, :T]


if __name__ == "__main__":
    # Small shapes consistent with the module's forward: x is (batch, expert_dim)
    batch, expert_dim, type_label = 8, 32, 4

    key = jax.random.PRNGKey(0)
    kx, kw, kb = jax.random.split(key, 3)

    x = jax.random.normal(kx, (batch, expert_dim), dtype=jnp.float32)
    # Deterministic param init (uniform like PyTorch's default Linear init bound)
    bound = 1.0 / (expert_dim ** 0.5)
    weight = jax.random.uniform(kw, (expert_dim, type_label), jnp.float32, -bound, bound)
    bias = jax.random.uniform(kb, (type_label,), jnp.float32, -bound, bound)

    # Module-init: pad / cast the parameters once, outside the forward hot path.
    w_pad, b_pad, T = prepare_arg_params(weight, bias)

    out = arg_module_forward(x, w_pad, b_pad, T)
    out = jax.block_until_ready(out)

    # Reference check in plain JAX (f32). bf16 matmul inputs give ~1e-3 relative
    # error on the logits; the softmax normalization itself is exact now.
    ref = jax.nn.softmax(x @ weight + bias, axis=1)
    assert out.shape == (batch, type_label)
    assert jnp.allclose(out, ref, atol=2e-3, rtol=2e-3), "mismatch vs reference"
    assert jnp.allclose(jnp.sum(out, axis=1), 1.0, atol=1e-5)

    print("KERNEL_OK")
</pallas_src>

<mosaic_0001>
module attributes {stable_mosaic.version = 11 : i64} {
  func.func @_arg_kernel(%arg0: i32, %arg1: memref<8x32xbf16, #tpu.memory_space<vmem>>, %arg2: memref<32x128xbf16, #tpu.memory_space<vmem>>, %arg3: memref<1x128xf32, #tpu.memory_space<vmem>>, %arg4: memref<8x128xf32, #tpu.memory_space<vmem>>) attributes {dimension_semantics = [#tpu.dimension_semantics<parallel>], iteration_bounds = array<i64: 1>, scalar_prefetch = 0 : i64, scratch_operands = 0 : i64, tpu.core_type = #tpu.core_type<tc>, window_params = [{transform_indices = @transform_0, window_bounds = array<i64: 8, 32>}, {pipeline_mode = #tpu.pipeline_mode<synchronous>, transform_indices = @transform_1, window_bounds = array<i64: 32, 128>}, {pipeline_mode = #tpu.pipeline_mode<synchronous>, transform_indices = @transform_2, window_bounds = array<i64: 1, 128>}, {transform_indices = @transform_3, window_bounds = array<i64: 8, 128>}]} {
    %c0 = arith.constant 0 : index
    %c0_0 = arith.constant 0 : index
    %0 = vector.load %arg1[%c0, %c0_0] : memref<8x32xbf16, #tpu.memory_space<vmem>>, vector<8x32xbf16>
    %c0_1 = arith.constant 0 : index
    %c0_2 = arith.constant 0 : index
    %1 = vector.load %arg2[%c0_1, %c0_2] : memref<32x128xbf16, #tpu.memory_space<vmem>>, vector<32x128xbf16>
    %cst = arith.constant dense<0.000000e+00> : vector<8x128xf32>
    %2 = tpu.matmul %0, %1, %cst {dimension_numbers = #tpu.dot_dimension_numbers<[1], [0], [0], [1], [0, 0, 1, 1], [], []>} : vector<8x32xbf16>, vector<32x128xbf16>, vector<8x128xf32> -> vector<8x128xf32>
    %c0_3 = arith.constant 0 : index
    %c0_4 = arith.constant 0 : index
    %3 = vector.load %arg3[%c0_3, %c0_4] : memref<1x128xf32, #tpu.memory_space<vmem>>, vector<1x128xf32>
    %4 = vector.broadcast %3 : vector<1x128xf32> to vector<8x128xf32>
    %5 = arith.addf %2, %4 : vector<8x128xf32>
    %cst_5 = arith.constant dense<0xFF800000> : vector<8xf32>
    %6 = vector.multi_reduction <maximumf>, %5, %cst_5 [1] : vector<8x128xf32> to vector<8xf32>
    %7 = vector.shape_cast %6 : vector<8xf32> to vector<8x1xf32>
    %8 = vector.broadcast %7 : vector<8x1xf32> to vector<8x128xf32>
    %9 = arith.subf %5, %8 : vector<8x128xf32>
    %10 = math.exp %9 : vector<8x128xf32>
    %cst_6 = arith.constant dense<0.000000e+00> : vector<8xf32>
    %11 = vector.multi_reduction <add>, %10, %cst_6 [1] : vector<8x128xf32> to vector<8xf32>
    %12 = vector.shape_cast %11 : vector<8xf32> to vector<8x1xf32>
    %13 = vector.broadcast %12 : vector<8x1xf32> to vector<8x128xf32>
    %14 = arith.divf %10, %13 : vector<8x128xf32>
    %c0_7 = arith.constant 0 : index
    %c0_8 = arith.constant 0 : index
    %15 = vector.load %arg4[%c0_7, %c0_8] : memref<8x128xf32, #tpu.memory_space<vmem>>, vector<8x128xf32>
    tpu.vector_store %arg4[%c0_7, %c0_8], %14 {strides = array<i32>} : memref<8x128xf32, #tpu.memory_space<vmem>>, vector<8x128xf32>,
    return
  }
  func.func @transform_0(%arg0: i32) -> (i32, i32) {
    %c0_i32 = arith.constant 0 : i32
    %c0_i32_0 = arith.constant 0 : i32
    return %arg0, %c0_i32 : i32, i32
  }
  func.func @transform_1(%arg0: i32) -> (i32, i32) {
    %c0_i32 = arith.constant 0 : i32
    %c0_i32_0 = arith.constant 0 : i32
    %c0_i32_1 = arith.constant 0 : i32
    return %c0_i32, %c0_i32_0 : i32, i32
  }
  func.func @transform_2(%arg0: i32) -> (i32, i32) {
    %c0_i32 = arith.constant 0 : i32
    %c0_i32_0 = arith.constant 0 : i32
    %c0_i32_1 = arith.constant 0 : i32
    return %c0_i32, %c0_i32_0 : i32, i32
  }
  func.func @transform_3(%arg0: i32) -> (i32, i32) {
    %c0_i32 = arith.constant 0 : i32
    %c0_i32_0 = arith.constant 0 : i32
    return %arg0, %c0_i32 : i32, i32
  }
}

module attributes {stable_mosaic.version = 11 : i64} {
  func.func @_arg_kernel(%arg0: i32, %arg1: memref<8x32xbf16, #tpu.memory_space<vmem>>, %arg2: memref<32x128xbf16, #tpu.memory_space<vmem>>, %arg3: memref<1x128xf32, #tpu.memory_space<vmem>>, %arg4: memref<8x128xf32, #tpu.memory_space<vmem>>) attributes {dimension_semantics = [#tpu.dimension_semantics<parallel>], iteration_bounds = array<i64: 1>, scalar_prefetch = 0 : i64, scratch_operands = 0 : i64, tpu.core_type = #tpu.core_type<tc>, window_params = [{transform_indices = @transform_0, window_bounds = array<i64: 8, 32>}, {pipeline_mode = #tpu.pipeline_mode<synchronous>, transform_indices = @transform_1, window_bounds = array<i64: 32, 128>}, {pipeline_mode = #tpu.pipeline_mode<synchronous>, transform_indices = @transform_2, window_bounds = array<i64: 1, 128>}, {transform_indices = @transform_3, window_bounds = array<i64: 8, 128>}]} {
    %c0 = arith.constant 0 : index
    %c0_0 = arith.constant 0 : index
    %0 = vector.load %arg1[%c0, %c0_0] : memref<8x32xbf16, #tpu.memory_space<vmem>>, vector<8x32xbf16>
    %c0_1 = arith.constant 0 : index
    %c0_2 = arith.constant 0 : index
    %1 = vector.load %arg2[%c0_1, %c0_2] : memref<32x128xbf16, #tpu.memory_space<vmem>>, vector<32x128xbf16>
    %cst = arith.constant dense<0.000000e+00> : vector<8x128xf32>
    %2 = tpu.matmul %0, %1, %cst {dimension_numbers = #tpu.dot_dimension_numbers<[1], [0], [0], [1], [0, 0, 1, 1], [], []>} : vector<8x32xbf16>, vector<32x128xbf16>, vector<8x128xf32> -> vector<8x128xf32>
    %c0_3 = arith.constant 0 : index
    %c0_4 = arith.constant 0 : index
    %3 = vector.load %arg3[%c0_3, %c0_4] : memref<1x128xf32, #tpu.memory_space<vmem>>, vector<1x128xf32>
    %4 = vector.broadcast %3 : vector<1x128xf32> to vector<8x128xf32>
    %5 = arith.addf %2, %4 : vector<8x128xf32>
    %cst_5 = arith.constant dense<0xFF800000> : vector<8xf32>
    %6 = vector.multi_reduction <maximumf>, %5, %cst_5 [1] : vector<8x128xf32> to vector<8xf32>
    %7 = vector.shape_cast %6 : vector<8xf32> to vector<8x1xf32>
    %8 = vector.broadcast %7 : vector<8x1xf32> to vector<8x128xf32>
    %9 = arith.subf %5, %8 : vector<8x128xf32>
    %10 = math.exp %9 : vector<8x128xf32>
    %cst_6 = arith.constant dense<0.000000e+00> : vector<8xf32>
    %11 = vector.multi_reduction <add>, %10, %cst_6 [1] : vector<8x128xf32> to vector<8xf32>
    %12 = vector.shape_cast %11 : vector<8xf32> to vector<8x1xf32>
    %13 = vector.broadcast %12 : vector<8x1xf32> to vector<8x128xf32>
    %14 = arith.divf %10, %13 : vector<8x128xf32>
    %c0_7 = arith.constant 0 : index
    %c0_8 = arith.constant 0 : index
    %15 = vector.load %arg4[%c0_7, %c0_8] : memref<8x128xf32, #tpu.memory_space<vmem>>, vector<8x128xf32>
    tpu.vector_store %arg4[%c0_7, %c0_8], %14 {strides = array<i32>} : memref<8x128xf32, #tpu.memory_space<vmem>>, vector<8x128xf32>,
    return
  }
  func.func @transform_0(%arg0: i32) -> (i32, i32) {
    %c0_i32 = arith.constant 0 : i32
    %c0_i32_0 = arith.constant 0 : i32
    return %arg0, %c0_i32 : i32, i32
  }
  func.func @transform_1(%arg0: i32) -> (i32, i32) {
    %c0_i32 = arith.constant 0 : i32
    %c0_i32_0 = arith.constant 0 : i32
    %c0_i32_1 = arith.constant 0 : i32
    return %c0_i32, %c0_i32_0 : i32, i32
  }
  func.func @transform_2(%arg0: i32) -> (i32, i32) {
    %c0_i32 = arith.constant 0 : i32
    %c0_i32_0 = arith.constant 0 : i32
    %c0_i32_1 = arith.constant 0 : i32
    return %c0_i32, %c0_i32_0 : i32, i32
  }
  func.func @transform_3(%arg0: i32) -> (i32, i32) {
    %c0_i32 = arith.constant 0 : i32
    %c0_i32_0 = arith.constant 0 : i32
    return %arg0, %c0_i32 : i32, i32
  }
}

</mosaic_0001>

<llo_original>
// kernel: tpu_custom_call.1
$region0: #{tpu_custom_call.1}
  #allocation0 [shape = 'u32[]', space=smem, size = 0x4, offset = 0x4, fixed_abs, tag = 'smem constant byte address 0x4 - core index']
  #allocation1 [shape = 'u32[72,128]{1,0:T(1,128)}', space=vmem, size = 0x9000, scoped, tag = 'internal scratch']
  %s0 = inlined_call_operand.hbm [shape: bf16[8,32], index: 0, kind: input, shape index: {}]
  %s1 = inlined_call_operand.hbm [shape: bf16[32,128], index: 1, kind: input, shape index: {}]
  %s2 = inlined_call_operand.vmem [shape: f32[1,128], index: 2, kind: input, shape index: {}]
  %s3 = inlined_call_operand.hbm [shape: f32[8,128], index: 3, kind: output, shape index: {}]
  %s4 = sld [smem:[#allocation0]]
  $region30: #{tpu_custom_call.1} parent=0
    _
  %s6 = ssub.s32 1, %s4
  %s7 = scalar_select 0, %s6, %s4
  $region1: #{tpu_custom_call.1} parent=0
    #allocation2 [shape = 'u8[2048]{0}', space=vmem, size = 0x800, scoped, tag = 'input window, operand 0, single buffered']
    #allocation3 [shape = 's32[1]{0}', space=sflag, size = 0x4, scoped, tag = 'scoped memory for tpu_custom_call.1']
    #allocation4 [shape = 's32[1]{0}', space=sflag, size = 0x4, scoped, tag = 'scoped memory for tpu_custom_call.1']
    #allocation5 [shape = 'u8[8192]{0}', space=vmem, size = 0x2000, scoped, tag = 'input window, operand 1, single buffered']
    #allocation6 [shape = 's32[1]{0}', space=sflag, size = 0x4, scoped, tag = 'scoped memory for tpu_custom_call.1']
    #allocation7 [shape = 'u8[4096]{0}', space=vmem, size = 0x1000, scoped, tag = 'output window, operand 0, single buffered']
    %8 = vsyncpa [#allocation3], 0
    %9 = vsyncpa [#allocation6], 0
    %10 = vsyncpa [#allocation4], 0
    // Predicated region
    $region2: #{tpu_custom_call.1} parent=1 // pred_check
      _
    $region3: #{tpu_custom_call.1} parent=1 // pred_check_branch
      %12 = sbr.rel (0) target = $region5
    $region4: #{tpu_custom_call.1} parent=1 // pred_region
      %14 = vsyncadd [#allocation3], 0
      %s16 = sshll.u32 %s0, 4
      %s17 = int_to_ptr.hbm [resolvable:$true] %s16
      %s18 = sshll.u32 [#allocation2], 4
      %s19 = int_to_ptr.vmem [resolvable:$true] %s18
      %21 = dma.hbm_to_vmem [thread:$0]  %s17, 64, %s19, [#allocation3]
    $region5: #{tpu_custom_call.1} parent=1 // pred_fallthru
      _
    // Predicated region
    $region6: #{tpu_custom_call.1} parent=1 // pred_check
      _
    $region7: #{tpu_custom_call.1} parent=1 // pred_check_branch
      %23 = sbr.rel (0) target = $region9
    $region8: #{tpu_custom_call.1} parent=1 // pred_region
      %25 = vsyncadd [#allocation6], 0
      %s26 = sshll.u32 %s1, 4
      %s27 = int_to_ptr.hbm [resolvable:$true] %s26
      %s28 = sshll.u32 [#allocation5], 4
      %s29 = int_to_ptr.vmem [resolvable:$true] %s28
      %34 = dma.hbm_to_vmem [thread:$0]  %s27, 256, %s29, [#allocation6], 64, 64, 4
    $region9: #{tpu_custom_call.1} parent=1 // pred_fallthru
      _
    // Predicated region
    $region10: #{tpu_custom_call.1} parent=1 // pred_check
      _
    $region11: #{tpu_custom_call.1} parent=1 // pred_check_branch
      %36 = sbr.rel (0) target = $region13
    $region12: #{tpu_custom_call.1} parent=1 // pred_region
      _
    $region13: #{tpu_custom_call.1} parent=1 // pred_fallthru
      _
    // Predicated region
    $region14: #{tpu_custom_call.1} parent=1 // pred_check
      _
    $region15: #{tpu_custom_call.1} parent=1 // pred_check_branch
      %38 = sbr.rel (0) target = $region17
    $region16: #{tpu_custom_call.1} parent=1 // pred_region
      %40 = dma.done [#allocation3], 64
    $region17: #{tpu_custom_call.1} parent=1 // pred_fallthru
      _
    // Predicated region
    $region18: #{tpu_custom_call.1} parent=1 // pred_check
      _
    $region19: #{tpu_custom_call.1} parent=1 // pred_check_branch
      %42 = sbr.rel (0) target = $region21
    $region20: #{tpu_custom_call.1} parent=1 // pred_region
      %44 = dma.done [#allocation6], 256
    $region21: #{tpu_custom_call.1} parent=1 // pred_fallthru
      _
    %v46 = vld [vmem:[#allocation2] sm:$0xf]
    %v47 = vld [vmem:[#allocation5] sm:$0xf]
    %v48 = vld [vmem:[#allocation5 + $0x4] sm:$0xf]
    %v49 = vld [vmem:[#allocation5 + $0x8] sm:$0xf]
    %v50 = vld [vmem:[#allocation5 + $0xc] sm:$0xf]
    %v51 = vld [vmem:[%s2] sm:$0x1]
    %v53 = vperm.slane %v51, 0
    %v59 = vunpack.c.l.b16 %v47
    %v60 = vunpack.c.l.b16 %v48
    %v61 = vunpack.c.l.b16 %v49
    %v62 = vunpack.c.l.b16 %v50
    %v63 = vpack.c.b16 %v60, %v59
    %v64 = vpack.c.b16 %v62, %v61
    %vm67 = vcmask 261120
    %v69 = vsel %vm67, %v46, 0
    %71 = vmatpush.bf16.msra.mxu0 0
    %72 = vmatpush.bf16.msra.mxu0 0
    %73 = vmatpush.bf16.msra.mxu0 0
    %74 = vmatpush.bf16.msra.mxu0 0
    %75 = vmatpush.bf16.msra.mxu0 0
    %76 = vmatpush.bf16.msra.mxu0 0
    %77 = vmatpush.bf16.msra.mxu0 %v64
    %78 = vmatpush.bf16.msra.mxu0 %v63
    %79 = vmatmul.bf16.gmra.mxu0 %v69
    %v80 = vpop.f32.mrf.mxu0
    %v81 = vadd.f32 %v53, %v80
    %v82 = vpop.f32.mrf.mxu0
    %83 = vdwg.mxu0
    %84 = vmax.xlane.f32.xlu0 %v81
    %v85 = vpop.xlane.xlu0 %84
    %v86 = vsub.f32 %v81, %v85
    %v87 = vmul.f32 %v86, 1.442695
    %v88 = vpow.pop %v87
    %89 = vadd.xlane.f32.xlu0 %v88
    %v90 = vpop.xlane.xlu0 %89
    %v91 = vrcp.pop %v90
    %v92 = vmul.f32 %v90, %v91
    %v93 = vsub.f32 1.0, %v92
    %v94 = vmul.f32 %v91, %v93
    %v95 = vadd.f32 %v91, %v94
    %vm96 = vweird.f32 %v90
    %vm97 = vweird.f32 %v91
    %vm98 = vmor %vm96, %vm97
    %v99 = vsel %vm98, %v91, %v95
    %v100 = vand.u32 2147483647, %v90
    %vm101 = vcmp.eq.f32.partialorder %v100, 8.507059e+37
    %v102 = vand.u32 %v90, 2147483648
    %v103 = vor.u32 1.1754944e-38, %v102
    %v104 = vsel %vm101, %v103, %v99
    %v105 = vmul.f32 %v88, %v104
    %106 = vst [vmem:[#allocation7] sm:$0xff] %v105
    // Predicated region
    $region22: #{tpu_custom_call.1} parent=1 // pred_check
      _
    $region23: #{tpu_custom_call.1} parent=1 // pred_check_branch
      %108 = sbr.rel (0) target = $region25
    $region24: #{tpu_custom_call.1} parent=1 // pred_region
      %110 = vsyncadd [#allocation4], 0
      %s112 = sshll.u32 [#allocation7], 4
      %s113 = int_to_ptr.vmem [resolvable:$true] %s112
      %s114 = sshll.u32 %s3, 4
      %s115 = int_to_ptr.hbm [resolvable:$true] %s114
      %117 = dma.vmem_to_hbm [thread:$0]  %s113, 128, %s115, [#allocation4]
    $region25: #{tpu_custom_call.1} parent=1 // pred_fallthru
      _
    // Predicated region
    $region26: #{tpu_custom_call.1} parent=1 // pred_check
      _
    $region27: #{tpu_custom_call.1} parent=1 // pred_check_branch
      %119 = sbr.rel (0) target = $region29
    $region28: #{tpu_custom_call.1} parent=1 // pred_region
      %121 = dma.done [#allocation4], 128
    $region29: #{tpu_custom_call.1} parent=1 // pred_fallthru
      _
    %122 = vsyncpa [#allocation3], 1
    %123 = vsyncpa [#allocation6], 1
    %124 = vsyncpa [#allocation4], 1

// kernel: tpu_custom_call.1
$region0: #{tpu_custom_call.1}
  #allocation0 [shape = 'u32[]', space=smem, size = 0x4, offset = 0x4, fixed_abs, tag = 'smem constant byte address 0x4 - core index']
  #allocation1 [shape = 'u32[72,128]{1,0:T(1,128)}', space=vmem, size = 0x9000, scoped, tag = 'internal scratch']
  %s0 = inlined_call_operand.hbm [shape: bf16[8,32], index: 0, kind: input, shape index: {}]
  %s1 = inlined_call_operand.hbm [shape: bf16[32,128], index: 1, kind: input, shape index: {}]
  %s2 = inlined_call_operand.vmem [shape: f32[1,128], index: 2, kind: input, shape index: {}]
  %s3 = inlined_call_operand.hbm [shape: f32[8,128], index: 3, kind: output, shape index: {}]
  %s4 = sld [smem:[#allocation0]]
  $region30: #{tpu_custom_call.1} parent=0
    _
  %s6 = ssub.s32 1, %s4
  %s7 = scalar_select 0, %s6, %s4
  $region1: #{tpu_custom_call.1} parent=0
    #allocation2 [shape = 'u8[2048]{0}', space=vmem, size = 0x800, scoped, tag = 'input window, operand 0, single buffered']
    #allocation3 [shape = 's32[1]{0}', space=sflag, size = 0x4, scoped, tag = 'scoped memory for tpu_custom_call.1']
    #allocation4 [shape = 's32[1]{0}', space=sflag, size = 0x4, scoped, tag = 'scoped memory for tpu_custom_call.1']
    #allocation5 [shape = 'u8[8192]{0}', space=vmem, size = 0x2000, scoped, tag = 'input window, operand 1, single buffered']
    #allocation6 [shape = 's32[1]{0}', space=sflag, size = 0x4, scoped, tag = 'scoped memory for tpu_custom_call.1']
    #allocation7 [shape = 'u8[4096]{0}', space=vmem, size = 0x1000, scoped, tag = 'output window, operand 0, single buffered']
    %8 = vsyncpa [#allocation3], 0
    %9 = vsyncpa [#allocation6], 0
    %10 = vsyncpa [#allocation4], 0
    // Predicated region
    $region2: #{tpu_custom_call.1} parent=1 // pred_check
      _
    $region3: #{tpu_custom_call.1} parent=1 // pred_check_branch
      %12 = sbr.rel (0) target = $region5
    $region4: #{tpu_custom_call.1} parent=1 // pred_region
      %14 = vsyncadd [#allocation3], 0
      %s16 = sshll.u32 %s0, 4
      %s17 = int_to_ptr.hbm [resolvable:$true] %s16
      %s18 = sshll.u32 [#allocation2], 4
      %s19 = int_to_ptr.vmem [resolvable:$true] %s18
      %21 = dma.hbm_to_vmem [thread:$0]  %s17, 64, %s19, [#allocation3]
    $region5: #{tpu_custom_call.1} parent=1 // pred_fallthru
      _
    // Predicated region
    $region6: #{tpu_custom_call.1} parent=1 // pred_check
      _
    $region7: #{tpu_custom_call.1} parent=1 // pred_check_branch
      %23 = sbr.rel (0) target = $region9
    $region8: #{tpu_custom_call.1} parent=1 // pred_region
      %25 = vsyncadd [#allocation6], 0
      %s26 = sshll.u32 %s1, 4
      %s27 = int_to_ptr.hbm [resolvable:$true] %s26
      %s28 = sshll.u32 [#allocation5], 4
      %s29 = int_to_ptr.vmem [resolvable:$true] %s28
      %34 = dma.hbm_to_vmem [thread:$0]  %s27, 256, %s29, [#allocation6], 64, 64, 4
    $region9: #{tpu_custom_call.1} parent=1 // pred_fallthru
      _
    // Predicated region
    $region10: #{tpu_custom_call.1} parent=1 // pred_check
      _
    $region11: #{tpu_custom_call.1} parent=1 // pred_check_branch
      %36 = sbr.rel (0) target = $region13
    $region12: #{tpu_custom_call.1} parent=1 // pred_region
      _
    $region13: #{tpu_custom_call.1} parent=1 // pred_fallthru
      _
    // Predicated region
    $region14: #{tpu_custom_call.1} parent=1 // pred_check
      _
    $region15: #{tpu_custom_call.1} parent=1 // pred_check_branch
      %38 = sbr.rel (0) target = $region17
    $region16: #{tpu_custom_call.1} parent=1 // pred_region
      %40 = dma.done [#allocation3], 64
    $region17: #{tpu_custom_call.1} parent=1 // pred_fallthru
      _
    // Predicated region
    $region18: #{tpu_custom_call.1} parent=1 // pred_check
      _
    $region19: #{tpu_custom_call.1} parent=1 // pred_check_branch
      %42 = sbr.rel (0) target = $region21
    $region20: #{tpu_custom_call.1} parent=1 // pred_region
      %44 = dma.done [#allocation6], 256
    $region21: #{tpu_custom_call.1} parent=1 // pred_fallthru
      _
    %v46 = vld [vmem:[#allocation2] sm:$0xf]
    %v47 = vld [vmem:[#allocation5] sm:$0xf]
    %v48 = vld [vmem:[#allocation5 + $0x4] sm:$0xf]
    %v49 = vld [vmem:[#allocation5 + $0x8] sm:$0xf]
    %v50 = vld [vmem:[#allocation5 + $0xc] sm:$0xf]
    %v51 = vld [vmem:[%s2] sm:$0x1]
    %v53 = vperm.slane %v51, 0
    %v59 = vunpack.c.l.b16 %v47
    %v60 = vunpack.c.l.b16 %v48
    %v61 = vunpack.c.l.b16 %v49
    %v62 = vunpack.c.l.b16 %v50
    %v63 = vpack.c.b16 %v60, %v59
    %v64 = vpack.c.b16 %v62, %v61
    %vm67 = vcmask 261120
    %v69 = vsel %vm67, %v46, 0
    %71 = vmatpush.bf16.msra.mxu0 0
    %72 = vmatpush.bf16.msra.mxu0 0
    %73 = vmatpush.bf16.msra.mxu0 0
    %74 = vmatpush.bf16.msra.mxu0 0
    %75 = vmatpush.bf16.msra.mxu0 0
    %76 = vmatpush.bf16.msra.mxu0 0
    %77 = vmatpush.bf16.msra.mxu0 %v64
    %78 = vmatpush.bf16.msra.mxu0 %v63
    %79 = vmatmul.bf16.gmra.mxu0 %v69
    %v80 = vpop.f32.mrf.mxu0
    %v81 = vadd.f32 %v53, %v80
    %v82 = vpop.f32.mrf.mxu0
    %83 = vdwg.mxu0
    %84 = vmax.xlane.f32.xlu0 %v81
    %v85 = vpop.xlane.xlu0 %84
    %v86 = vsub.f32 %v81, %v85
    %v87 = vmul.f32 %v86, 1.442695
    %v88 = vpow.pop %v87
    %89 = vadd.xlane.f32.xlu0 %v88
    %v90 = vpop.xlane.xlu0 %89
    %v91 = vrcp.pop %v90
    %v92 = vmul.f32 %v90, %v91
    %v93 = vsub.f32 1.0, %v92
    %v94 = vmul.f32 %v91, %v93
    %v95 = vadd.f32 %v91, %v94
    %vm96 = vweird.f32 %v90
    %vm97 = vweird.f32 %v91
    %vm98 = vmor %vm96, %vm97
    %v99 = vsel %vm98, %v91, %v95
    %v100 = vand.u32 2147483647, %v90
    %vm101 = vcmp.eq.f32.partialorder %v100, 8.507059e+37
    %v102 = vand.u32 %v90, 2147483648
    %v103 = vor.u32 1.1754944e-38, %v102
    %v104 = vsel %vm101, %v103, %v99
    %v105 = vmul.f32 %v88, %v104
    %106 = vst [vmem:[#allocation7] sm:$0xff] %v105
    // Predicated region
    $region22: #{tpu_custom_call.1} parent=1 // pred_check
      _
    $region23: #{tpu_custom_call.1} parent=1 // pred_check_branch
      %108 = sbr.rel (0) target = $region25
    $region24: #{tpu_custom_call.1} parent=1 // pred_region
      %110 = vsyncadd [#allocation4], 0
      %s112 = sshll.u32 [#allocation7], 4
      %s113 = int_to_ptr.vmem [resolvable:$true] %s112
      %s114 = sshll.u32 %s3, 4
      %s115 = int_to_ptr.hbm [resolvable:$true] %s114
      %117 = dma.vmem_to_hbm [thread:$0]  %s113, 128, %s115, [#allocation4]
    $region25: #{tpu_custom_call.1} parent=1 // pred_fallthru
      _
    // Predicated region
    $region26: #{tpu_custom_call.1} parent=1 // pred_check
      _
    $region27: #{tpu_custom_call.1} parent=1 // pred_check_branch
      %119 = sbr.rel (0) target = $region29
    $region28: #{tpu_custom_call.1} parent=1 // pred_region
      %121 = dma.done [#allocation4], 128
    $region29: #{tpu_custom_call.1} parent=1 // pred_fallthru
      _
    %122 = vsyncpa [#allocation3], 1
    %123 = vsyncpa [#allocation6], 1
    %124 = vsyncpa [#allocation4], 1

</llo_original>
